<compile_context>
chip_gen: v6e
topology: v6e:2x2x1
jax: 0.10.0
libtpu: 0.0.40
codegen_flags: <defaults>
</compile_context>

<pallas_src>
import jax
import jax.numpy as jnp
from jax import lax
from jax.experimental import pallas as pl
from jax.experimental.pallas import tpu as pltpu


def _chip_budgets():
    """Returns (input double-buffer budget in bytes, vmem_limit_bytes or None)."""
    try:
        kind = jax.devices()[0].device_kind.lower()
    except Exception:
        kind = ""
    if "v7" in kind or "7x" in kind:
        # v7x: only 64 MiB physical VMEM per TC -> bigger tiles, but stay well inside.
        return (32 << 20), (48 << 20)
    if "v6" in kind:
        # v6e: 128 MiB physical VMEM -> raise the scoped limit and grow tiles.
        return (24 << 20), (48 << 20)
    # v5e / unknown: fits the 16 MiB default scoped VMEM, no override needed.
    return (8 << 20), None


def _make_dice_sums_kernel(K: int, TK: int, n_kpc: int, needs_mask: bool):
    """Kernel computing per-row partial sums (sum t, sum x, sum x*t) over spatial tiles."""
    K = int(K)
    TK = int(TK)
    n_kpc = int(n_kpc)
    needs_mask = bool(needs_mask)

    def kernel(x_ref, t_ref, st_ref, sx_ref, sxt_ref):
        k = pl.program_id(2)

        @pl.when(k == 0)
        def _init():
            st_ref[...] = jnp.zeros_like(st_ref)
            sx_ref[...] = jnp.zeros_like(sx_ref)
            sxt_ref[...] = jnp.zeros_like(sxt_ref)

        # Cast AFTER the DMA so HBM traffic stays in the on-wire dtype.
        x = x_ref[...].astype(jnp.float32)   # (TB, TK) probability-map tile
        t = t_ref[...].astype(jnp.float32)   # (TB, TK) binary-target tile

        if needs_mask:
            # Zero lanes past the true spatial extent: the ragged last tile and any
            # fully out-of-range (clamped, re-read) tile of the last spatial chunk.
            off = (pl.program_id(1) * n_kpc + k) * TK
            lane = lax.broadcasted_iota(jnp.int32, (1, TK), 1)
            valid = lane < (K - off)
            x = jnp.where(valid, x, 0.0)
            t = jnp.where(valid, t, 0.0)

        # Per-row partial spatial sums accumulated in the VMEM-resident output blocks.
        st_ref[...] += jnp.sum(t, axis=-1, keepdims=True)[None]
        sx_ref[...] += jnp.sum(x, axis=-1, keepdims=True)[None]
        sxt_ref[...] += jnp.sum(x * t, axis=-1, keepdims=True)[None]

    return kernel


def binary_generalized_dice_loss(inp, target):
    """inp, target: (B, 1, H, W). Returns the sum-reduced generalized dice loss (f32 scalar)."""
    B, C, H, W = inp.shape
    assert C == 1, "module assumes a single channel (probability map for class 1)"
    assert target.shape == inp.shape
    K = H * W

    # Pure metadata reshape -> lane-dense (B, H*W) layout.  No padding, no copies.
    x = inp.reshape(B, K)
    t = target.reshape(B, K)

    bytes_pair = jnp.dtype(x.dtype).itemsize + jnp.dtype(t.dtype).itemsize
    min_item = min(jnp.dtype(x.dtype).itemsize, jnp.dtype(t.dtype).itemsize)
    sub = max(8, 32 // max(min_item, 1))   # dtype-aware sublane minimum: f32->8, bf16->16, i8->32

    budget, vmem_limit = _chip_budgets()

    # ---- spatial tile: full K if it fits the budget (full-dim block is exempt from the
    #      128-lane divisibility rule), otherwise the largest 128-multiple that fits ----
    base_rows = B if B <= sub else sub
    if 2 * base_rows * K * bytes_pair <= budget:
        TK = K
    else:
        TK = max(128, (budget // (2 * base_rows * bytes_pair)) // 128 * 128)
    n_k = pl.cdiv(K, TK)

    # ---- batch tile: fill sublanes, grow while the budget allows and >=2 batch tiles
    #      remain (keeps a >=2-extent parallel axis for v7x's two TensorCores) ----
    if B <= sub:
        TB = B                               # full-dim block: exempt from the 8-sublane rule
    else:
        TB = sub
        while (TB < 512 and TB * 4 <= B
               and 2 * (TB * 2) * TK * bytes_pair <= budget):
            TB *= 2
    n_b = pl.cdiv(B, TB)

    # ---- 2-way parallel spatial chunking when the batch axis alone cannot feed 2 TCs ----
    NC = 2 if (n_b == 1 and n_k >= 2) else 1
    n_kpc = pl.cdiv(n_k, NC)
    clamp = NC * n_kpc > n_k                 # last chunk may have a fully-OOB logical tile
    needs_mask = (NC * n_kpc * TK) != K

    def in_map(i, c, k):
        jb = c * n_kpc + k
        if clamp:
            jb = jnp.minimum(jb, n_k - 1)    # re-read last valid tile; mask zeroes it out
        return (i, jb)

    def out_map(i, c, k):
        return (c, i, 0)

    kernel = _make_dice_sums_kernel(K, TK, n_kpc, needs_mask)

    compiler_kwargs = dict(dimension_semantics=("parallel", "parallel", "arbitrary"))
    if vmem_limit is not None:
        compiler_kwargs["vmem_limit_bytes"] = int(vmem_limit)

    out_sds = jax.ShapeDtypeStruct((NC, B, 1), jnp.float32)
    out_spec = pl.BlockSpec((1, TB, 1), out_map)

    st, sx, sxt = pl.pallas_call(
        kernel,
        out_shape=(out_sds, out_sds, out_sds),
        grid_spec=pltpu.PrefetchScalarGridSpec(
            num_scalar_prefetch=0,
            grid=(n_b, NC, n_kpc),           # (batch tiles, spatial chunks, tiles per chunk)
            in_specs=[
                pl.BlockSpec((TB, TK), in_map),
                pl.BlockSpec((TB, TK), in_map),
            ],
            out_specs=[out_spec, out_spec, out_spec],
        ),
        compiler_params=pltpu.CompilerParams(**compiler_kwargs),
        cost_estimate=pl.CostEstimate(
            flops=5 * B * K,
            transcendentals=0,
            bytes_accessed=B * K * bytes_pair + 3 * NC * B * 4,
        ),
    )(x, t)

    # ---- tiny O(B) dice formula in plain XLA (combines the per-chunk partial sums) ----
    s_t = st.sum(axis=0)[:, 0]               # target.sum((2,3))            = n_1
    s_x = sx.sum(axis=0)[:, 0]               # input.sum((2,3))
    s_xt = sxt.sum(axis=0)[:, 0]             # (input*target).sum((2,3))

    n_px = float(K)
    n_1 = s_t
    n_0 = n_px - s_t                          # (1 - target).sum
    w_1 = 1.0 / (n_1 * n_1)
    w_0 = 1.0 / (n_0 * n_0)
    # ((1-x)*(1-t)).sum = N - s_x - s_t + s_xt ; (x+t).sum = s_x + s_t ; (2 - x - t).sum = 2N - s_x - s_t
    wt_intersect = w_1 * s_xt + w_0 * (n_px - s_x - s_t + s_xt)
    wt_union = w_1 * (s_x + s_t) + w_0 * (2.0 * n_px - s_x - s_t)
    cost = 1.0 - 2.0 * wt_intersect / (wt_union + 1e-7)
    # Note: an all-zero (or all-one) target row yields inf/NaN exactly like the PyTorch module.
    return cost.sum()


def _reference_loss(inp, target):
    """Pure-JAX reference mirroring the PyTorch forward exactly."""
    inp = inp.astype(jnp.float32)
    target = target.astype(jnp.float32)
    n_1 = target.sum((2, 3))
    w_1 = 1.0 / (n_1 * n_1)
    n_0 = (1.0 - target).sum((2, 3))
    w_0 = 1.0 / (n_0 * n_0)
    wt_intersect = (w_1 * (inp * target).sum((2, 3))
                    + w_0 * ((1.0 - inp) * (1.0 - target)).sum((2, 3)))
    wt_union = (w_1 * (inp + target).sum((2, 3))
                + w_0 * (1.0 - inp + (1.0 - target)).sum((2, 3)))
    cost = 1.0 - 2.0 * wt_intersect / (wt_union + 1e-7)
    return cost.sum()


if __name__ == "__main__":
    key = jax.random.PRNGKey(0)
    k1, k2, k3, k4 = jax.random.split(key, 4)

    # Primary small test: (B, 1, H, W) = (2, 1, 16, 16)
    B, C, H, W = 2, 1, 16, 16
    inp = jax.random.uniform(k1, (B, C, H, W), dtype=jnp.float32)
    target = (jax.random.uniform(k2, (B, C, H, W), dtype=jnp.float32) > 0.5).astype(jnp.float32)
    loss = jax.block_until_ready(binary_generalized_dice_loss(inp, target))
    ref = _reference_loss(inp, target)
    assert jnp.allclose(loss, ref, rtol=1e-4, atol=1e-4), (loss, ref)

    # Second small test exercising a ragged last batch tile (B not a multiple of TB=8),
    # relying on Pallas block clipping (no padding, no wasted DMA).
    B2 = 11
    inp2 = jax.random.uniform(k3, (B2, C, H, W), dtype=jnp.float32)
    target2 = (jax.random.uniform(k4, (B2, C, H, W), dtype=jnp.float32) > 0.5).astype(jnp.float32)
    loss2 = jax.block_until_ready(binary_generalized_dice_loss(inp2, target2))
    ref2 = _reference_loss(inp2, target2)
    assert jnp.allclose(loss2, ref2, rtol=1e-4, atol=1e-4), (loss2, ref2)

    print("KERNEL_OK")
</pallas_src>

<mosaic_0001>
module attributes {stable_mosaic.version = 11 : i64} {
  func.func @kernel(%arg0: i32, %arg1: i32, %arg2: i32, %arg3: memref<2x256xf32, #tpu.memory_space<vmem>>, %arg4: memref<2x256xf32, #tpu.memory_space<vmem>>, %arg5: memref<1x2x1xf32, #tpu.memory_space<vmem>>, %arg6: memref<1x2x1xf32, #tpu.memory_space<vmem>>, %arg7: memref<1x2x1xf32, #tpu.memory_space<vmem>>) attributes {dimension_semantics = [#tpu.dimension_semantics<parallel>, #tpu.dimension_semantics<parallel>, #tpu.dimension_semantics<arbitrary>], iteration_bounds = array<i64: 1, 1, 1>, scalar_prefetch = 0 : i64, scratch_operands = 0 : i64, tpu.core_type = #tpu.core_type<tc>, window_params = [{transform_indices = @transform_0, window_bounds = array<i64: 2, 256>}, {transform_indices = @transform_1, window_bounds = array<i64: 2, 256>}, {transform_indices = @transform_2, window_bounds = array<i64: 1, 2, 1>}, {transform_indices = @transform_3, window_bounds = array<i64: 1, 2, 1>}, {transform_indices = @transform_4, window_bounds = array<i64: 1, 2, 1>}]} {
    %c0_i32 = arith.constant 0 : i32
    %0 = arith.cmpi eq, %arg2, %c0_i32 : i32
    %1 = arith.extui %0 : i1 to i32
    %c0_i32_0 = arith.constant 0 : i32
    %2 = arith.cmpi ne, %1, %c0_i32_0 : i32
    scf.if %2 {
      %cst_24 = arith.constant 0.000000e+00 : f32
      %24 = vector.broadcast %cst_24 : f32 to vector<1x2x1xf32>
      %c0_25 = arith.constant 0 : index
      %c0_26 = arith.constant 0 : index
      %c0_27 = arith.constant 0 : index
      %25 = vector.load %arg5[%c0_25, %c0_26, %c0_27] : memref<1x2x1xf32, #tpu.memory_space<vmem>>, vector<1x2x1xf32>
      tpu.vector_store %arg5[%c0_25, %c0_26, %c0_27], %24 {strides = array<i32>} : memref<1x2x1xf32, #tpu.memory_space<vmem>>, vector<1x2x1xf32>,
      %cst_28 = arith.constant 0.000000e+00 : f32
      %26 = vector.broadcast %cst_28 : f32 to vector<1x2x1xf32>
      %c0_29 = arith.constant 0 : index
      %c0_30 = arith.constant 0 : index
      %c0_31 = arith.constant 0 : index
      %27 = vector.load %arg6[%c0_29, %c0_30, %c0_31] : memref<1x2x1xf32, #tpu.memory_space<vmem>>, vector<1x2x1xf32>
      tpu.vector_store %arg6[%c0_29, %c0_30, %c0_31], %26 {strides = array<i32>} : memref<1x2x1xf32, #tpu.memory_space<vmem>>, vector<1x2x1xf32>,
      %cst_32 = arith.constant 0.000000e+00 : f32
      %28 = vector.broadcast %cst_32 : f32 to vector<1x2x1xf32>
      %c0_33 = arith.constant 0 : index
      %c0_34 = arith.constant 0 : index
      %c0_35 = arith.constant 0 : index
      %29 = vector.load %arg7[%c0_33, %c0_34, %c0_35] : memref<1x2x1xf32, #tpu.memory_space<vmem>>, vector<1x2x1xf32>
      tpu.vector_store %arg7[%c0_33, %c0_34, %c0_35], %28 {strides = array<i32>} : memref<1x2x1xf32, #tpu.memory_space<vmem>>, vector<1x2x1xf32>,
    } else {
    }
    %c0 = arith.constant 0 : index
    %c0_1 = arith.constant 0 : index
    %3 = vector.load %arg3[%c0, %c0_1] : memref<2x256xf32, #tpu.memory_space<vmem>>, vector<2x256xf32>
    %c0_2 = arith.constant 0 : index
    %c0_3 = arith.constant 0 : index
    %4 = vector.load %arg4[%c0_2, %c0_3] : memref<2x256xf32, #tpu.memory_space<vmem>>, vector<2x256xf32>
    %c0_4 = arith.constant 0 : index
    %c0_5 = arith.constant 0 : index
    %c0_6 = arith.constant 0 : index
    %5 = vector.load %arg5[%c0_4, %c0_5, %c0_6] : memref<1x2x1xf32, #tpu.memory_space<vmem>>, vector<1x2x1xf32>
    %cst = arith.constant dense<0.000000e+00> : vector<2xf32>
    %6 = vector.multi_reduction <add>, %4, %cst [1] : vector<2x256xf32> to vector<2xf32>
    %7 = vector.shape_cast %6 : vector<2xf32> to vector<2x1xf32>
    %8 = vector.shape_cast %7 : vector<2x1xf32> to vector<1x2x1xf32>
    %9 = arith.addf %5, %8 : vector<1x2x1xf32>
    %c0_7 = arith.constant 0 : index
    %c0_8 = arith.constant 0 : index
    %c0_9 = arith.constant 0 : index
    %10 = vector.load %arg5[%c0_7, %c0_8, %c0_9] : memref<1x2x1xf32, #tpu.memory_space<vmem>>, vector<1x2x1xf32>
    tpu.vector_store %arg5[%c0_7, %c0_8, %c0_9], %9 {strides = array<i32>} : memref<1x2x1xf32, #tpu.memory_space<vmem>>, vector<1x2x1xf32>,
    %c0_10 = arith.constant 0 : index
    %c0_11 = arith.constant 0 : index
    %c0_12 = arith.constant 0 : index
    %11 = vector.load %arg6[%c0_10, %c0_11, %c0_12] : memref<1x2x1xf32, #tpu.memory_space<vmem>>, vector<1x2x1xf32>
    %cst_13 = arith.constant dense<0.000000e+00> : vector<2xf32>
    %12 = vector.multi_reduction <add>, %3, %cst_13 [1] : vector<2x256xf32> to vector<2xf32>
    %13 = vector.shape_cast %12 : vector<2xf32> to vector<2x1xf32>
    %14 = vector.shape_cast %13 : vector<2x1xf32> to vector<1x2x1xf32>
    %15 = arith.addf %11, %14 : vector<1x2x1xf32>
    %c0_14 = arith.constant 0 : index
    %c0_15 = arith.constant 0 : index
    %c0_16 = arith.constant 0 : index
    %16 = vector.load %arg6[%c0_14, %c0_15, %c0_16] : memref<1x2x1xf32, #tpu.memory_space<vmem>>, vector<1x2x1xf32>
    tpu.vector_store %arg6[%c0_14, %c0_15, %c0_16], %15 {strides = array<i32>} : memref<1x2x1xf32, #tpu.memory_space<vmem>>, vector<1x2x1xf32>,
    %c0_17 = arith.constant 0 : index
    %c0_18 = arith.constant 0 : index
    %c0_19 = arith.constant 0 : index
    %17 = vector.load %arg7[%c0_17, %c0_18, %c0_19] : memref<1x2x1xf32, #tpu.memory_space<vmem>>, vector<1x2x1xf32>
    %18 = arith.mulf %3, %4 : vector<2x256xf32>
    %cst_20 = arith.constant dense<0.000000e+00> : vector<2xf32>
    %19 = vector.multi_reduction <add>, %18, %cst_20 [1] : vector<2x256xf32> to vector<2xf32>
    %20 = vector.shape_cast %19 : vector<2xf32> to vector<2x1xf32>
    %21 = vector.shape_cast %20 : vector<2x1xf32> to vector<1x2x1xf32>
    %22 = arith.addf %17, %21 : vector<1x2x1xf32>
    %c0_21 = arith.constant 0 : index
    %c0_22 = arith.constant 0 : index
    %c0_23 = arith.constant 0 : index
    %23 = vector.load %arg7[%c0_21, %c0_22, %c0_23] : memref<1x2x1xf32, #tpu.memory_space<vmem>>, vector<1x2x1xf32>
    tpu.vector_store %arg7[%c0_21, %c0_22, %c0_23], %22 {strides = array<i32>} : memref<1x2x1xf32, #tpu.memory_space<vmem>>, vector<1x2x1xf32>,
    return
  }
  func.func @transform_0(%arg0: i32, %arg1: i32, %arg2: i32) -> (i32, i32) {
    %c1_i32 = arith.constant 1 : i32
    %0 = arith.muli %arg1, %c1_i32 : i32
    %1 = arith.addi %0, %arg2 : i32
    %c0_i32 = arith.constant 0 : i32
    return %arg0, %1 : i32, i32
  }
  func.func @transform_1(%arg0: i32, %arg1: i32, %arg2: i32) -> (i32, i32) {
    %c1_i32 = arith.constant 1 : i32
    %0 = arith.muli %arg1, %c1_i32 : i32
    %1 = arith.addi %0, %arg2 : i32
    %c0_i32 = arith.constant 0 : i32
    return %arg0, %1 : i32, i32
  }
  func.func @transform_2(%arg0: i32, %arg1: i32, %arg2: i32) -> (i32, i32, i32) {
    %c0_i32 = arith.constant 0 : i32
    %c0_i32_0 = arith.constant 0 : i32
    return %arg1, %arg0, %c0_i32 : i32, i32, i32
  }
  func.func @transform_3(%arg0: i32, %arg1: i32, %arg2: i32) -> (i32, i32, i32) {
    %c0_i32 = arith.constant 0 : i32
    %c0_i32_0 = arith.constant 0 : i32
    return %arg1, %arg0, %c0_i32 : i32, i32, i32
  }
  func.func @transform_4(%arg0: i32, %arg1: i32, %arg2: i32) -> (i32, i32, i32) {
    %c0_i32 = arith.constant 0 : i32
    %c0_i32_0 = arith.constant 0 : i32
    return %arg1, %arg0, %c0_i32 : i32, i32, i32
  }
}

</mosaic_0001>

<llo_original>
// kernel: tpu_custom_call.1
$region0: #{tpu_custom_call.1}
  #allocation0 [shape = 'u32[]', space=smem, size = 0x4, offset = 0x4, fixed_abs, tag = 'smem constant byte address 0x4 - core index']
  #allocation1 [shape = 'u32[144,128]{1,0:T(1,128)}', space=vmem, size = 0x12000, scoped, tag = 'internal scratch']
  %s0 = inlined_call_operand.hbm [shape: f32[2,256], index: 0, kind: input, shape index: {}]
  %s1 = inlined_call_operand.hbm [shape: f32[2,256], index: 1, kind: input, shape index: {}]
  %s2 = inlined_call_operand.vmem [shape: f32[1,2,1], index: 2, kind: output, shape index: {0}]
  %s3 = inlined_call_operand.vmem [shape: f32[1,2,1], index: 3, kind: output, shape index: {1}]
  %s4 = inlined_call_operand.vmem [shape: f32[1,2,1], index: 4, kind: output, shape index: {2}]
  %5 = xla_tuple %s2, %s3, %s4
  %s6 = sld [smem:[#allocation0]]
  $region46: #{tpu_custom_call.1} parent=0
    _
  %s8 = ssub.s32 1, %s6
  %s9 = scalar_select 0, %s8, %s6
  $region1: #{tpu_custom_call.1} parent=0
    #allocation2 [shape = 'u8[2048]{0}', space=vmem, size = 0x800, scoped, tag = 'input window, operand 0, single buffered']
    #allocation3 [shape = 's32[1]{0}', space=sflag, size = 0x4, scoped, tag = 'scoped memory for tpu_custom_call.1']
    #allocation4 [shape = 'u8[2048]{0}', space=vmem, size = 0x800, scoped, tag = 'input window, operand 1, single buffered']
    #allocation5 [shape = 's32[1]{0}', space=sflag, size = 0x4, scoped, tag = 'scoped memory for tpu_custom_call.1']
    %10 = vsyncpa [#allocation3], 0
    %11 = vsyncpa [#allocation5], 0
    // Predicated region
    $region2: #{tpu_custom_call.1} parent=1 // pred_check
      _
    $region3: #{tpu_custom_call.1} parent=1 // pred_check_branch
      %13 = sbr.rel (0) target = $region5
    $region4: #{tpu_custom_call.1} parent=1 // pred_region
      %s14 = sadd.s32 0, 0
      %s15 = smul.u32 2, %s14
      %s17 = ssub.s32 64, 64
      %18 = vsyncadd [#allocation3], %s17
      %s19 = smul.addr %s15, 32
      %s20 = scalar_lea.hbm %s0, %s19
      %s22 = sshll.u32 [#allocation2], 4
      %s23 = int_to_ptr.vmem [resolvable:$true] %s22
      %25 = dma.hbm_to_vmem [thread:$0]  %s20, 64, %s23, [#allocation3]
    $region5: #{tpu_custom_call.1} parent=1 // pred_fallthru
      _
    // Predicated region
    $region6: #{tpu_custom_call.1} parent=1 // pred_check
      _
    $region7: #{tpu_custom_call.1} parent=1 // pred_check_branch
      %27 = sbr.rel (0) target = $region9
    $region8: #{tpu_custom_call.1} parent=1 // pred_region
      %s28 = sadd.s32 0, 0
      %s29 = smul.u32 2, %s28
      %s31 = ssub.s32 64, 64
      %32 = vsyncadd [#allocation5], %s31
      %s33 = smul.addr %s29, 32
      %s34 = scalar_lea.hbm %s1, %s33
      %s36 = sshll.u32 [#allocation4], 4
      %s37 = int_to_ptr.vmem [resolvable:$true] %s36
      %39 = dma.hbm_to_vmem [thread:$0]  %s34, 64, %s37, [#allocation5]
    $region9: #{tpu_custom_call.1} parent=1 // pred_fallthru
      _
    // Predicated region
    $region10: #{tpu_custom_call.1} parent=1 // pred_check
      _
    $region11: #{tpu_custom_call.1} parent=1 // pred_check_branch
      %41 = sbr.rel (0) target = $region13
    $region12: #{tpu_custom_call.1} parent=1 // pred_region
      %42 = dma.done [#allocation3], 64
    $region13: #{tpu_custom_call.1} parent=1 // pred_fallthru
      _
    // Predicated region
    $region14: #{tpu_custom_call.1} parent=1 // pred_check
      _
    $region15: #{tpu_custom_call.1} parent=1 // pred_check_branch
      %44 = sbr.rel (0) target = $region17
    $region16: #{tpu_custom_call.1} parent=1 // pred_region
      %45 = dma.done [#allocation5], 64
    $region17: #{tpu_custom_call.1} parent=1 // pred_fallthru
      _
    %s46 = sadd.s32 0, 0
    %s47 = smul.u32 2, %s46
    %s48 = sadd.s32 0, 0
    %s49 = smul.u32 2, %s48
    %p50 = scmp.eq.s32.totalorder 0, 0
    // Predicated region
    $region18: #{tpu_custom_call.1} parent=1 // pred_check
      %p51 = pneg %p50
    $region19: #{tpu_custom_call.1} parent=1 // pred_check_branch
      %53 = sbr.rel (%p51) target = $region21
    $region20: #{tpu_custom_call.1} parent=1 // pred_region
      %vm54 = vcmask 1024
      %55 = vst.msk [vmem:[%s2] sm:$0x3] %vm54, 0.0
      %56 = vst.msk [vmem:[%s3] sm:$0x3] %vm54, 0.0
      %57 = vst.msk [vmem:[%s4] sm:$0x3] %vm54, 0.0
    $region21: #{tpu_custom_call.1} parent=1 // pred_fallthru
      _
    %v58 = vld [vmem:[#allocation2] sm:$0xf]
    %v59 = vld [vmem:[#allocation4] sm:$0xf]
    %v60 = vld [vmem:[%s2] sm:$0x3]
    %v63 = vunpack.c.l.s4 1983009808
    %v64 = vunpack.c.0.s8 %v63
    %v65 = vlaneseq
    %v66 = vshrl.u32 %v65, 7
    %v67 = vsub.s32 %v64, %v66
    %v68 = vrot.slane %v59, %v67
    %v69 = vcombine.high %v68, %v68
    %vm72 = vcmask 1041408
    %v73 = vsel %vm72, %v68, 0.0
    %v74 = vsel %vm72, %v69, 0.0
    %v75 = vadd.f32 %v73, %v74
    %76 = vadd.xlane.f32.xlu0 %v75
    %v77 = vpop.xlane.xlu0 %76
    %v78 = vadd.f32 %v60, %v77
    %vm79 = vcmask 1024
    %80 = vst.msk [vmem:[%s2] sm:$0x3] %vm79, %v78
    %v81 = vld [vmem:[%s3] sm:$0x3]
    %v84 = vunpack.c.l.s4 1983009808
    %v85 = vunpack.c.0.s8 %v84
    %v86 = vlaneseq
    %v87 = vshrl.u32 %v86, 7
    %v88 = vsub.s32 %v85, %v87
    %v89 = vrot.slane %v58, %v88
    %v90 = vcombine.high %v89, %v89
    %v93 = vsel %vm72, %v89, 0.0
    %v94 = vsel %vm72, %v90, 0.0
    %v95 = vadd.f32 %v93, %v94
    %96 = vadd.xlane.f32.xlu0 %v95
    %v97 = vpop.xlane.xlu0 %96
    %v98 = vadd.f32 %v81, %v97
    %99 = vst.msk [vmem:[%s3] sm:$0x3] %vm79, %v98
    %v100 = vld [vmem:[%s4] sm:$0x3]
    %v101 = vmul.f32 %v58, %v59
    %v104 = vunpack.c.l.s4 1983009808
    %v105 = vunpack.c.0.s8 %v104
    %v106 = vlaneseq
    %v107 = vshrl.u32 %v106, 7
    %v108 = vsub.s32 %v105, %v107
    %v109 = vrot.slane %v101, %v108
    %v110 = vcombine.high %v109, %v109
    %v113 = vsel %vm72, %v109, 0.0
    %v114 = vsel %vm72, %v110, 0.0
    %v115 = vadd.f32 %v113, %v114
    %116 = vadd.xlane.f32.xlu0 %v115
    %v117 = vpop.xlane.xlu0 %116
    %v118 = vadd.f32 %v100, %v117
    %119 = vst.msk [vmem:[%s4] sm:$0x3] %vm79, %v118
    // Predicated region
    $region22: #{tpu_custom_call.1} parent=1 // pred_check
      _
    $region23: #{tpu_custom_call.1} parent=1 // pred_check_branch
      %121 = sbr.rel (0) target = $region25
    $region24: #{tpu_custom_call.1} parent=1 // pred_region
      _
    $region25: #{tpu_custom_call.1} parent=1 // pred_fallthru
      _
    // Predicated region
    $region26: #{tpu_custom_call.1} parent=1 // pred_check
      _
    $region27: #{tpu_custom_call.1} parent=1 // pred_check_branch
      %123 = sbr.rel (0) target = $region29
    $region28: #{tpu_custom_call.1} parent=1 // pred_region
      _
    $region29: #{tpu_custom_call.1} parent=1 // pred_fallthru
      _
    // Predicated region
    $region30: #{tpu_custom_call.1} parent=1 // pred_check
      _
    $region31: #{tpu_custom_call.1} parent=1 // pred_check_branch
      %125 = sbr.rel (0) target = $region33
    $region32: #{tpu_custom_call.1} parent=1 // pred_region
      _
    $region33: #{tpu_custom_call.1} parent=1 // pred_fallthru
      _
    // Predicated region
    $region34: #{tpu_custom_call.1} parent=1 // pred_check
      _
    $region35: #{tpu_custom_call.1} parent=1 // pred_check_branch
      %127 = sbr.rel (0) target = $region37
    $region36: #{tpu_custom_call.1} parent=1 // pred_region
      _
    $region37: #{tpu_custom_call.1} parent=1 // pred_fallthru
      _
    // Predicated region
    $region38: #{tpu_custom_call.1} parent=1 // pred_check
      _
    $region39: #{tpu_custom_call.1} parent=1 // pred_check_branch
      %129 = sbr.rel (0) target = $region41
    $region40: #{tpu_custom_call.1} parent=1 // pred_region
      _
    $region41: #{tpu_custom_call.1} parent=1 // pred_fallthru
      _
    // Predicated region
    $region42: #{tpu_custom_call.1} parent=1 // pred_check
      _
    $region43: #{tpu_custom_call.1} parent=1 // pred_check_branch
      %131 = sbr.rel (0) target = $region45
    $region44: #{tpu_custom_call.1} parent=1 // pred_region
      _
    $region45: #{tpu_custom_call.1} parent=1 // pred_fallthru
      _
    %132 = vsyncpa [#allocation3], 1
    %133 = vsyncpa [#allocation5], 1

</llo_original>
